<compile_context>
chip_gen: v7x
topology: tpu7x:2x2x1
jax: 0.10.0
libtpu: 0.0.40
codegen_flags: <defaults>
</compile_context>

<pallas_src>
import functools

import jax
import jax.numpy as jnp
from jax.experimental import pallas as pl
from jax.experimental.pallas import tpu as pltpu


def _relu(v):
    return jnp.maximum(v, 0.0)


def _round_up(x, m):
    return ((x + m - 1) // m) * m


# ------------------------------------------------------------------------------ kernel


def vae_kernel(x_ref, we1_ref, wms_ref, wd1_ref, wdo_ref, vec_ref, scal_ref,
               out_ref, *, num_joints, latent_size):
    J, L = num_joints, latent_size
    f32 = jnp.float32

    x = x_ref[...]                        # [Kin, bb]  rows: q^T | eps^T | ones | zeros

    # Column-vector params ([H,1], lane-broadcast).  Leading-dim indexing only.
    e_w2 = vec_ref[0]                     # encoder hidden -> 1 weight
    e_w3 = vec_ref[1]                     # encoder 1 -> hidden weight
    e_b3 = vec_ref[2]
    e_bms = vec_ref[3][:2 * L]            # fused (mu | log sigma) bias  [2L, 1]
    d_b1 = vec_ref[4]
    d_w2 = vec_ref[5]
    d_w3 = vec_ref[6]
    d_b3 = vec_ref[7]
    d_bo = vec_ref[8][:J]                 # [J, 1]
    e_b2 = scal_ref[0]                    # true scalar biases from SMEM (free broadcast)
    d_b2 = scal_ref[1]

    # ---- encoder (feature-major: activations are [features, batch]) ----
    # linear1 bias is folded into the matmul via the ones-row of x.
    h = _relu(jnp.dot(we1_ref[...], x, preferred_element_type=f32))        # [H, bb]
    t = _relu(jnp.sum(h * e_w2, axis=0, keepdims=True) + e_b2)             # [1, bb]
    h = _relu(h + e_w3 * t + e_b3)                                         # [H, bb]
    ms = jnp.dot(wms_ref[...], h, preferred_element_type=f32) + e_bms      # [2L, bb]
    mu = ms[:L, :]                                                         # [L, bb]
    sigma = jnp.exp(ms[L:2 * L, :])                                        # [L, bb]

    # ---- reparameterization (eps rows of the input slab) ----
    eps = x[J:J + L, :]
    z = mu + sigma * eps                                                   # [L, bb]

    # ---- decoder ----
    hd = _relu(jnp.dot(wd1_ref[...], z, preferred_element_type=f32) + d_b1)    # [H, bb]
    td = _relu(jnp.sum(hd * d_w2, axis=0, keepdims=True) + d_b2)               # [1, bb]
    hd = _relu(hd + d_w3 * td + d_b3)                                          # [H, bb]
    xo = jnp.dot(wdo_ref[...], hd, preferred_element_type=f32) + d_bo          # [J, bb]

    # ---- lane-dense output slab: [x^T ; mu^T ; sigma^T] (vreg-aligned sublane writes)
    out_ref[0:J, :] = xo
    out_ref[J:J + L, :] = mu
    out_ref[J + L:J + 2 * L, :] = sigma


# ------------------------------------------------------------------------------ params


def init_linear(key, in_features, out_features):
    """PyTorch-style uniform(-1/sqrt(fan_in), 1/sqrt(fan_in)) init, torch layout.
    Returns (W [out, in], b [out])."""
    kw, kb = jax.random.split(key)
    bound = 1.0 / float(in_features) ** 0.5
    w = jax.random.uniform(kw, (out_features, in_features), jnp.float32, -bound, bound)
    b = jax.random.uniform(kb, (out_features,), jnp.float32, -bound, bound)
    return w, b


def make_params(key, num_joints, hidden_size, latent_size):
    J, H, L = num_joints, hidden_size, latent_size
    ks = jax.random.split(key, 9)
    p = {}
    p["e_w1"], p["e_b1"] = init_linear(ks[0], J, H)
    p["e_w2"], p["e_b2"] = init_linear(ks[1], H, 1)
    p["e_w3"], p["e_b3"] = init_linear(ks[2], 1, H)
    p["e_wmu"], p["e_bmu"] = init_linear(ks[3], H, L)
    p["e_ws"], p["e_bs"] = init_linear(ks[4], H, L)
    p["d_w1"], p["d_b1"] = init_linear(ks[5], L, H)
    p["d_w2"], p["d_b2"] = init_linear(ks[6], H, 1)
    p["d_w3"], p["d_b3"] = init_linear(ks[7], 1, H)
    p["d_wo"], p["d_bo"] = init_linear(ks[8], H, J)
    return p


def pack_params(p, num_joints, hidden_size, latent_size):
    """Feature-major packing: natural-shape weights + a [9, H, 1] column slab + SMEM scalars."""
    J, H, L = num_joints, hidden_size, latent_size
    assert H >= max(2 * L, J), "hidden_size must cover the packed column vectors"
    kin = _round_up(J + L + 1, 8)                    # q | eps | ones row, sublane-aligned

    # encoder linear1 with its bias folded in (ones row sits at column J+L of the input slab)
    w_e1a = jnp.zeros((H, kin), jnp.float32)
    w_e1a = w_e1a.at[:, :J].set(p["e_w1"])
    w_e1a = w_e1a.at[:, J + L].set(p["e_b1"])

    w_ems = jnp.concatenate([p["e_wmu"], p["e_ws"]], axis=0)     # [2L, H] fused mu|sigma
    w_d1 = p["d_w1"]                                             # [H, L]
    w_do = p["d_wo"]                                             # [J, H]

    def col(v):
        v = jnp.asarray(v, jnp.float32).reshape(-1)
        return jnp.pad(v, (0, H - v.shape[0])).reshape(H, 1)

    vcols = jnp.stack([
        col(p["e_w2"][0]),                                       # hidden -> 1 weight
        col(p["e_w3"][:, 0]),                                    # 1 -> hidden weight
        col(p["e_b3"]),
        col(jnp.concatenate([p["e_bmu"], p["e_bs"]])),           # fused (mu|sigma) bias
        col(p["d_b1"]),
        col(p["d_w2"][0]),
        col(p["d_w3"][:, 0]),
        col(p["d_b3"]),
        col(p["d_bo"]),
    ])                                                           # [9, H, 1]

    scal = jnp.array([p["e_b2"][0], p["d_b2"][0]], jnp.float32)  # SMEM: e_b2, d_b2
    return w_e1a, w_ems, w_d1, w_do, vcols, scal, kin


# ----------------------------------------------------------------------------- wrapper


def vae_forward(q, eps, packed, *, num_joints, hidden_size, latent_size,
                batch_block=4096):
    J, H, L = num_joints, hidden_size, latent_size
    w_e1a, w_ems, w_d1, w_do, vcols, scal, kin = packed
    B = q.shape[0]
    out_rows = J + 2 * L

    # Batch lives on the 128-lane axis: pad to a lane multiple, pick a big block,
    # and guarantee >= 2 grid steps when possible so v7x's two TensorCores both work.
    b_lanes = _round_up(max(B, 1), 128)
    bb = _round_up(max(128, min(batch_block, b_lanes)), 128)
    if b_lanes >= 2 * 128:
        bb = min(bb, _round_up(pl.cdiv(b_lanes, 2), 128))
    b_pad = _round_up(b_lanes, bb)
    grid = (b_pad // bb,)

    # Feature-major streamed input slab: rows = q^T | eps^T | ones | zeros.
    x_slab = jnp.zeros((kin, b_pad), jnp.float32)
    x_slab = x_slab.at[:J, :B].set(q.T)
    x_slab = x_slab.at[J:J + L, :B].set(eps.T)
    x_slab = x_slab.at[J + L, :B].set(1.0)

    kernel = functools.partial(vae_kernel, num_joints=J, latent_size=L)
    resident2 = lambda i: (0, 0)

    out = pl.pallas_call(
        kernel,
        out_shape=jax.ShapeDtypeStruct((out_rows, b_pad), jnp.float32),
        grid=grid,
        in_specs=[
            pl.BlockSpec((kin, bb), lambda i: (0, i)),          # streamed q|eps|ones slab
            pl.BlockSpec(w_e1a.shape, resident2),               # resident weights (natural shapes)
            pl.BlockSpec(w_ems.shape, resident2),
            pl.BlockSpec(w_d1.shape, resident2),
            pl.BlockSpec(w_do.shape, resident2),
            pl.BlockSpec(vcols.shape, lambda i: (0, 0, 0)),     # bias/vector columns
            pl.BlockSpec(memory_space=pltpu.MemorySpace.SMEM),  # the 2 true scalar biases
        ],
        out_specs=pl.BlockSpec((out_rows, bb), lambda i: (0, i)),
        compiler_params=pltpu.CompilerParams(
            dimension_semantics=("parallel",),
        ),
    )(x_slab, w_e1a, w_ems, w_d1, w_do, vcols, scal)

    x = out[0:J, :B].T
    mu = out[J:J + L, :B].T
    sigma = out[J + L:, :B].T
    return x, mu, sigma


# -------------------------------------------------------------------------------- main


if __name__ == "__main__":
    num_joints, hidden_size, latent_size = 16, 32, 8

    key = jax.random.PRNGKey(0)
    k_params, k_q1, k_e1, k_q2, k_e2 = jax.random.split(key, 5)

    params = make_params(k_params, num_joints, hidden_size, latent_size)
    packed = pack_params(params, num_joints, hidden_size, latent_size)

    # Pure-JAX reference (same math as the PyTorch module, torch-layout weights).
    def ref(q, eps, p):
        relu = lambda v: jnp.maximum(v, 0.0)
        h = relu(q @ p["e_w1"].T + p["e_b1"])
        t = relu(h @ p["e_w2"].T + p["e_b2"])
        h = relu(h + (t @ p["e_w3"].T + p["e_b3"]))
        mu = h @ p["e_wmu"].T + p["e_bmu"]
        sigma = jnp.exp(h @ p["e_ws"].T + p["e_bs"])
        z = mu + sigma * eps
        hd = relu(z @ p["d_w1"].T + p["d_b1"])
        td = relu(hd @ p["d_w2"].T + p["d_b2"])
        hd = relu(hd + (td @ p["d_w3"].T + p["d_b3"]))
        x = hd @ p["d_wo"].T + p["d_bo"]
        return x, mu, sigma

    # Two cases: tiny (single grid step) and one that exercises padding + a 2-step grid.
    for batch, kq, ke in [(8, k_q1, k_e1), (300, k_q2, k_e2)]:
        q = jax.random.normal(kq, (batch, num_joints), jnp.float32)
        # torch.randn_like(sigma) equivalent (different RNG stream, same semantics).
        eps = jax.random.normal(ke, (batch, latent_size), jnp.float32)

        x, mu, sigma = vae_forward(
            q, eps, packed,
            num_joints=num_joints, hidden_size=hidden_size, latent_size=latent_size,
        )
        jax.block_until_ready((x, mu, sigma))

        xr, mur, sigr = ref(q, eps, params)
        assert jnp.allclose(x, xr, atol=1e-4, rtol=1e-4), f"x mismatch (batch={batch})"
        assert jnp.allclose(mu, mur, atol=1e-4, rtol=1e-4), f"mu mismatch (batch={batch})"
        assert jnp.allclose(sigma, sigr, atol=1e-4, rtol=1e-4), f"sigma mismatch (batch={batch})"

    print("KERNEL_OK")
</pallas_src>

<mosaic_0001>
module attributes {stable_mosaic.version = 11 : i64} {
  func.func @vae_kernel(%arg0: i32, %arg1: memref<32x128xf32, #tpu.memory_space<vmem>>, %arg2: memref<32x32xf32, #tpu.memory_space<vmem>>, %arg3: memref<16x32xf32, #tpu.memory_space<vmem>>, %arg4: memref<32x8xf32, #tpu.memory_space<vmem>>, %arg5: memref<16x32xf32, #tpu.memory_space<vmem>>, %arg6: memref<9x32x1xf32, #tpu.memory_space<vmem>>, %arg7: memref<2xf32, #tpu.memory_space<smem>>, %arg8: memref<32x128xf32, #tpu.memory_space<vmem>>) attributes {dimension_semantics = [#tpu.dimension_semantics<parallel>], iteration_bounds = array<i64: 1>, scalar_prefetch = 0 : i64, scratch_operands = 0 : i64, tpu.core_type = #tpu.core_type<tc>, window_params = [{transform_indices = @transform_0, window_bounds = array<i64: 32, 128>}, {pipeline_mode = #tpu.pipeline_mode<synchronous>, transform_indices = @transform_1, window_bounds = array<i64: 32, 32>}, {pipeline_mode = #tpu.pipeline_mode<synchronous>, transform_indices = @transform_2, window_bounds = array<i64: 16, 32>}, {pipeline_mode = #tpu.pipeline_mode<synchronous>, transform_indices = @transform_3, window_bounds = array<i64: 32, 8>}, {pipeline_mode = #tpu.pipeline_mode<synchronous>, transform_indices = @transform_4, window_bounds = array<i64: 16, 32>}, {pipeline_mode = #tpu.pipeline_mode<synchronous>, transform_indices = @transform_5, window_bounds = array<i64: 9, 32, 1>}, {transform_indices = @transform_6, window_bounds = array<i64: 2>}, {transform_indices = @transform_7, window_bounds = array<i64: 32, 128>}]} {
    %c0 = arith.constant 0 : index
    %c0_0 = arith.constant 0 : index
    %0 = vector.load %arg1[%c0, %c0_0] : memref<32x128xf32, #tpu.memory_space<vmem>>, vector<32x128xf32>
    %c0_1 = arith.constant 0 : index
    %c0_2 = arith.constant 0 : index
    %c0_3 = arith.constant 0 : index
    %1 = vector.load %arg6[%c0_1, %c0_2, %c0_3] : memref<9x32x1xf32, #tpu.memory_space<vmem>>, vector<1x32x1xf32>
    %2 = vector.shape_cast %1 : vector<1x32x1xf32> to vector<32x1xf32>
    %c1 = arith.constant 1 : index
    %c0_4 = arith.constant 0 : index
    %c0_5 = arith.constant 0 : index
    %3 = vector.load %arg6[%c1, %c0_4, %c0_5] : memref<9x32x1xf32, #tpu.memory_space<vmem>>, vector<1x32x1xf32>
    %4 = vector.shape_cast %3 : vector<1x32x1xf32> to vector<32x1xf32>
    %c2 = arith.constant 2 : index
    %c0_6 = arith.constant 0 : index
    %c0_7 = arith.constant 0 : index
    %5 = vector.load %arg6[%c2, %c0_6, %c0_7] : memref<9x32x1xf32, #tpu.memory_space<vmem>>, vector<1x32x1xf32>
    %6 = vector.shape_cast %5 : vector<1x32x1xf32> to vector<32x1xf32>
    %c3 = arith.constant 3 : index
    %c0_8 = arith.constant 0 : index
    %c0_9 = arith.constant 0 : index
    %7 = vector.load %arg6[%c3, %c0_8, %c0_9] : memref<9x32x1xf32, #tpu.memory_space<vmem>>, vector<1x32x1xf32>
    %8 = vector.shape_cast %7 : vector<1x32x1xf32> to vector<32x1xf32>
    %9 = vector.extract_strided_slice %8 {offsets = [0, 0], sizes = [16, 1], strides = [1, 1]} : vector<32x1xf32> to vector<16x1xf32>
    %c4 = arith.constant 4 : index
    %c0_10 = arith.constant 0 : index
    %c0_11 = arith.constant 0 : index
    %10 = vector.load %arg6[%c4, %c0_10, %c0_11] : memref<9x32x1xf32, #tpu.memory_space<vmem>>, vector<1x32x1xf32>
    %11 = vector.shape_cast %10 : vector<1x32x1xf32> to vector<32x1xf32>
    %c5 = arith.constant 5 : index
    %c0_12 = arith.constant 0 : index
    %c0_13 = arith.constant 0 : index
    %12 = vector.load %arg6[%c5, %c0_12, %c0_13] : memref<9x32x1xf32, #tpu.memory_space<vmem>>, vector<1x32x1xf32>
    %13 = vector.shape_cast %12 : vector<1x32x1xf32> to vector<32x1xf32>
    %c6 = arith.constant 6 : index
    %c0_14 = arith.constant 0 : index
    %c0_15 = arith.constant 0 : index
    %14 = vector.load %arg6[%c6, %c0_14, %c0_15] : memref<9x32x1xf32, #tpu.memory_space<vmem>>, vector<1x32x1xf32>
    %15 = vector.shape_cast %14 : vector<1x32x1xf32> to vector<32x1xf32>
    %c7 = arith.constant 7 : index
    %c0_16 = arith.constant 0 : index
    %c0_17 = arith.constant 0 : index
    %16 = vector.load %arg6[%c7, %c0_16, %c0_17] : memref<9x32x1xf32, #tpu.memory_space<vmem>>, vector<1x32x1xf32>
    %17 = vector.shape_cast %16 : vector<1x32x1xf32> to vector<32x1xf32>
    %c8 = arith.constant 8 : index
    %c0_18 = arith.constant 0 : index
    %c0_19 = arith.constant 0 : index
    %18 = vector.load %arg6[%c8, %c0_18, %c0_19] : memref<9x32x1xf32, #tpu.memory_space<vmem>>, vector<1x32x1xf32>
    %19 = vector.shape_cast %18 : vector<1x32x1xf32> to vector<32x1xf32>
    %20 = vector.extract_strided_slice %19 {offsets = [0, 0], sizes = [16, 1], strides = [1, 1]} : vector<32x1xf32> to vector<16x1xf32>
    %c0_20 = arith.constant 0 : index
    %21 = memref.load %arg7[%c0_20] : memref<2xf32, #tpu.memory_space<smem>>
    %c1_21 = arith.constant 1 : index
    %22 = memref.load %arg7[%c1_21] : memref<2xf32, #tpu.memory_space<smem>>
    %c0_22 = arith.constant 0 : index
    %c0_23 = arith.constant 0 : index
    %23 = vector.load %arg2[%c0_22, %c0_23] : memref<32x32xf32, #tpu.memory_space<vmem>>, vector<32x32xf32>
    %cst = arith.constant dense<0.000000e+00> : vector<32x128xf32>
    %24 = tpu.matmul %23, %0, %cst {dimension_numbers = #tpu.dot_dimension_numbers<[1], [0], [0], [1], [0, 0, 1, 1], [], []>} : vector<32x32xf32>, vector<32x128xf32>, vector<32x128xf32> -> vector<32x128xf32>
    %cst_24 = arith.constant 0.000000e+00 : f32
    %25 = vector.broadcast %cst_24 : f32 to vector<32x128xf32>
    %26 = arith.maximumf %24, %25 : vector<32x128xf32>
    %27 = vector.broadcast %2 : vector<32x1xf32> to vector<32x128xf32>
    %28 = arith.mulf %26, %27 : vector<32x128xf32>
    %cst_25 = arith.constant dense<0.000000e+00> : vector<128xf32>
    %29 = vector.multi_reduction <add>, %28, %cst_25 [0] : vector<32x128xf32> to vector<128xf32>
    %30 = vector.shape_cast %29 : vector<128xf32> to vector<1x128xf32>
    %31 = vector.broadcast %21 : f32 to vector<1x128xf32>
    %32 = arith.addf %30, %31 : vector<1x128xf32>
    %cst_26 = arith.constant 0.000000e+00 : f32
    %33 = vector.broadcast %cst_26 : f32 to vector<1x128xf32>
    %34 = arith.maximumf %32, %33 : vector<1x128xf32>
    %35 = vector.broadcast %4 : vector<32x1xf32> to vector<32x128xf32>
    %36 = vector.broadcast %34 : vector<1x128xf32> to vector<32x128xf32>
    %37 = arith.mulf %35, %36 : vector<32x128xf32>
    %38 = arith.addf %26, %37 : vector<32x128xf32>
    %39 = vector.broadcast %6 : vector<32x1xf32> to vector<32x128xf32>
    %40 = arith.addf %38, %39 : vector<32x128xf32>
    %cst_27 = arith.constant 0.000000e+00 : f32
    %41 = vector.broadcast %cst_27 : f32 to vector<32x128xf32>
    %42 = arith.maximumf %40, %41 : vector<32x128xf32>
    %c0_28 = arith.constant 0 : index
    %c0_29 = arith.constant 0 : index
    %43 = vector.load %arg3[%c0_28, %c0_29] : memref<16x32xf32, #tpu.memory_space<vmem>>, vector<16x32xf32>
    %cst_30 = arith.constant dense<0.000000e+00> : vector<16x128xf32>
    %44 = tpu.matmul %43, %42, %cst_30 {dimension_numbers = #tpu.dot_dimension_numbers<[1], [0], [0], [1], [0, 0, 1, 1], [], []>} : vector<16x32xf32>, vector<32x128xf32>, vector<16x128xf32> -> vector<16x128xf32>
    %45 = vector.broadcast %9 : vector<16x1xf32> to vector<16x128xf32>
    %46 = arith.addf %44, %45 : vector<16x128xf32>
    %47 = vector.extract_strided_slice %46 {offsets = [0, 0], sizes = [8, 128], strides = [1, 1]} : vector<16x128xf32> to vector<8x128xf32>
    %48 = vector.extract_strided_slice %46 {offsets = [8, 0], sizes = [8, 128], strides = [1, 1]} : vector<16x128xf32> to vector<8x128xf32>
    %49 = math.exp %48 : vector<8x128xf32>
    %50 = vector.extract_strided_slice %0 {offsets = [16, 0], sizes = [8, 128], strides = [1, 1]} : vector<32x128xf32> to vector<8x128xf32>
    %51 = arith.mulf %49, %50 : vector<8x128xf32>
    %52 = arith.addf %47, %51 : vector<8x128xf32>
    %c0_31 = arith.constant 0 : index
    %c0_32 = arith.constant 0 : index
    %53 = vector.load %arg4[%c0_31, %c0_32] : memref<32x8xf32, #tpu.memory_space<vmem>>, vector<32x8xf32>
    %cst_33 = arith.constant dense<0.000000e+00> : vector<32x128xf32>
    %54 = tpu.matmul %53, %52, %cst_33 {dimension_numbers = #tpu.dot_dimension_numbers<[1], [0], [0], [1], [0, 0, 1, 1], [], []>} : vector<32x8xf32>, vector<8x128xf32>, vector<32x128xf32> -> vector<32x128xf32>
    %55 = vector.broadcast %11 : vector<32x1xf32> to vector<32x128xf32>
    %56 = arith.addf %54, %55 : vector<32x128xf32>
    %cst_34 = arith.constant 0.000000e+00 : f32
    %57 = vector.broadcast %cst_34 : f32 to vector<32x128xf32>
    %58 = arith.maximumf %56, %57 : vector<32x128xf32>
    %59 = vector.broadcast %13 : vector<32x1xf32> to vector<32x128xf32>
    %60 = arith.mulf %58, %59 : vector<32x128xf32>
    %cst_35 = arith.constant dense<0.000000e+00> : vector<128xf32>
    %61 = vector.multi_reduction <add>, %60, %cst_35 [0] : vector<32x128xf32> to vector<128xf32>
    %62 = vector.shape_cast %61 : vector<128xf32> to vector<1x128xf32>
    %63 = vector.broadcast %22 : f32 to vector<1x128xf32>
    %64 = arith.addf %62, %63 : vector<1x128xf32>
    %cst_36 = arith.constant 0.000000e+00 : f32
    %65 = vector.broadcast %cst_36 : f32 to vector<1x128xf32>
    %66 = arith.maximumf %64, %65 : vector<1x128xf32>
    %67 = vector.broadcast %15 : vector<32x1xf32> to vector<32x128xf32>
    %68 = vector.broadcast %66 : vector<1x128xf32> to vector<32x128xf32>
    %69 = arith.mulf %67, %68 : vector<32x128xf32>
    %70 = arith.addf %58, %69 : vector<32x128xf32>
    %71 = vector.broadcast %17 : vector<32x1xf32> to vector<32x128xf32>
    %72 = arith.addf %70, %71 : vector<32x128xf32>
    %cst_37 = arith.constant 0.000000e+00 : f32
    %73 = vector.broadcast %cst_37 : f32 to vector<32x128xf32>
    %74 = arith.maximumf %72, %73 : vector<32x128xf32>
    %c0_38 = arith.constant 0 : index
    %c0_39 = arith.constant 0 : index
    %75 = vector.load %arg5[%c0_38, %c0_39] : memref<16x32xf32, #tpu.memory_space<vmem>>, vector<16x32xf32>
    %cst_40 = arith.constant dense<0.000000e+00> : vector<16x128xf32>
    %76 = tpu.matmul %75, %74, %cst_40 {dimension_numbers = #tpu.dot_dimension_numbers<[1], [0], [0], [1], [0, 0, 1, 1], [], []>} : vector<16x32xf32>, vector<32x128xf32>, vector<16x128xf32> -> vector<16x128xf32>
    %77 = vector.broadcast %20 : vector<16x1xf32> to vector<16x128xf32>
    %78 = arith.addf %76, %77 : vector<16x128xf32>
    %c0_41 = arith.constant 0 : index
    %c0_42 = arith.constant 0 : index
    %79 = vector.load %arg8[%c0_41, %c0_42] : memref<32x128xf32, #tpu.memory_space<vmem>>, vector<16x128xf32>
    tpu.vector_store %arg8[%c0_41, %c0_42], %78 {strides = array<i32>} : memref<32x128xf32, #tpu.memory_space<vmem>>, vector<16x128xf32>,
    %c16 = arith.constant 16 : index
    %c0_43 = arith.constant 0 : index
    %80 = vector.load %arg8[%c16, %c0_43] : memref<32x128xf32, #tpu.memory_space<vmem>>, vector<8x128xf32>
    tpu.vector_store %arg8[%c16, %c0_43], %47 {strides = array<i32>} : memref<32x128xf32, #tpu.memory_space<vmem>>, vector<8x128xf32>,
    %c24 = arith.constant 24 : index
    %c0_44 = arith.constant 0 : index
    %81 = vector.load %arg8[%c24, %c0_44] : memref<32x128xf32, #tpu.memory_space<vmem>>, vector<8x128xf32>
    tpu.vector_store %arg8[%c24, %c0_44], %49 {strides = array<i32>} : memref<32x128xf32, #tpu.memory_space<vmem>>, vector<8x128xf32>,
    return
  }
  func.func @transform_0(%arg0: i32) -> (i32, i32) {
    %c0_i32 = arith.constant 0 : i32
    %c0_i32_0 = arith.constant 0 : i32
    return %c0_i32, %arg0 : i32, i32
  }
  func.func @transform_1(%arg0: i32) -> (i32, i32) {
    %c0_i32 = arith.constant 0 : i32
    %c0_i32_0 = arith.constant 0 : i32
    %c0_i32_1 = arith.constant 0 : i32
    return %c0_i32, %c0_i32_0 : i32, i32
  }
  func.func @transform_2(%arg0: i32) -> (i32, i32) {
    %c0_i32 = arith.constant 0 : i32
    %c0_i32_0 = arith.constant 0 : i32
    %c0_i32_1 = arith.constant 0 : i32
    return %c0_i32, %c0_i32_0 : i32, i32
  }
  func.func @transform_3(%arg0: i32) -> (i32, i32) {
    %c0_i32 = arith.constant 0 : i32
    %c0_i32_0 = arith.constant 0 : i32
    %c0_i32_1 = arith.constant 0 : i32
    return %c0_i32, %c0_i32_0 : i32, i32
  }
  func.func @transform_4(%arg0: i32) -> (i32, i32) {
    %c0_i32 = arith.constant 0 : i32
    %c0_i32_0 = arith.constant 0 : i32
    %c0_i32_1 = arith.constant 0 : i32
    return %c0_i32, %c0_i32_0 : i32, i32
  }
  func.func @transform_5(%arg0: i32) -> (i32, i32, i32) {
    %c0_i32 = arith.constant 0 : i32
    %c0_i32_0 = arith.constant 0 : i32
    %c0_i32_1 = arith.constant 0 : i32
    %c0_i32_2 = arith.constant 0 : i32
    return %c0_i32, %c0_i32_0, %c0_i32_1 : i32, i32, i32
  }
  func.func @transform_6(%arg0: i32) -> i32 {
    %c0_i32 = arith.constant 0 : i32
    %c0_i32_0 = arith.constant 0 : i32
    return %c0_i32 : i32
  }
  func.func @transform_7(%arg0: i32) -> (i32, i32) {
    %c0_i32 = arith.constant 0 : i32
    %c0_i32_0 = arith.constant 0 : i32
    return %c0_i32, %arg0 : i32, i32
  }
}

</mosaic_0001>

<llo_original>
// kernel: tpu_custom_call.1
$region0: #{tpu_custom_call.1}
  #allocation0 [shape = 'u32[]', space=smem, size = 0x4, offset = 0x4, fixed_abs, tag = 'smem constant byte address 0x4 - core index']
  #allocation1 [shape = 'u32[144,128]{1,0:T(1,128)}', space=vmem, size = 0x12000, scoped, tag = 'internal scratch']
  %s0 = inlined_call_operand.vmem [shape: f32[32,128], index: 0, kind: input, shape index: {}]
  %s1 = inlined_call_operand.vmem [shape: f32[32,32], index: 1, kind: input, shape index: {}]
  %s2 = inlined_call_operand.vmem [shape: f32[16,32], index: 2, kind: input, shape index: {}]
  %s3 = inlined_call_operand.vmem [shape: f32[32,8], index: 3, kind: input, shape index: {}]
  %s4 = inlined_call_operand.vmem [shape: f32[16,32], index: 4, kind: input, shape index: {}]
  %s5 = inlined_call_operand.vmem [shape: f32[9,32,1], index: 5, kind: input, shape index: {}]
  %s6 = inlined_call_operand.vmem [shape: f32[2], index: 6, kind: input, shape index: {}]
  %s7 = inlined_call_operand.hbm [shape: f32[32,128], index: 7, kind: output, shape index: {}]
  %s8 = sld [smem:[#allocation0]]
  $region42: #{tpu_custom_call.1} parent=0
    _
  %s10 = ssub.s32 1, %s8
  %s11 = scalar_select 0, %s10, %s8
  $region1: #{tpu_custom_call.1} parent=0
    #allocation2 [shape = 'u8[512]{0}', space=smem, size = 0x200, scoped, tag = 'input window, operand 6, single buffered']
    #allocation3 [shape = 's32[1]{0}', space=sflag, size = 0x4, scoped, tag = 'scoped memory for tpu_custom_call.1']
    #allocation4 [shape = 's32[1]{0}', space=sflag, size = 0x4, scoped, tag = 'scoped memory for tpu_custom_call.1']
    #allocation5 [shape = 'u8[16384]{0}', space=vmem, size = 0x4000, scoped, tag = 'output window, operand 0, single buffered']
    %12 = vsyncpa [#allocation4], 0
    %13 = vsyncpa [#allocation3], 0
    // Predicated region
    $region2: #{tpu_custom_call.1} parent=1 // pred_check
      _
    $region3: #{tpu_custom_call.1} parent=1 // pred_check_branch
      %15 = sbr.rel (0) target = $region5
    $region4: #{tpu_custom_call.1} parent=1 // pred_region
      _
    $region5: #{tpu_custom_call.1} parent=1 // pred_fallthru
      _
    // Predicated region
    $region6: #{tpu_custom_call.1} parent=1 // pred_check
      _
    $region7: #{tpu_custom_call.1} parent=1 // pred_check_branch
      %17 = sbr.rel (0) target = $region9
    $region8: #{tpu_custom_call.1} parent=1 // pred_region
      _
    $region9: #{tpu_custom_call.1} parent=1 // pred_fallthru
      _
    // Predicated region
    $region10: #{tpu_custom_call.1} parent=1 // pred_check
      _
    $region11: #{tpu_custom_call.1} parent=1 // pred_check_branch
      %19 = sbr.rel (0) target = $region13
    $region12: #{tpu_custom_call.1} parent=1 // pred_region
      _
    $region13: #{tpu_custom_call.1} parent=1 // pred_fallthru
      _
    // Predicated region
    $region14: #{tpu_custom_call.1} parent=1 // pred_check
      _
    $region15: #{tpu_custom_call.1} parent=1 // pred_check_branch
      %21 = sbr.rel (0) target = $region17
    $region16: #{tpu_custom_call.1} parent=1 // pred_region
      _
    $region17: #{tpu_custom_call.1} parent=1 // pred_fallthru
      _
    // Predicated region
    $region18: #{tpu_custom_call.1} parent=1 // pred_check
      _
    $region19: #{tpu_custom_call.1} parent=1 // pred_check_branch
      %23 = sbr.rel (0) target = $region21
    $region20: #{tpu_custom_call.1} parent=1 // pred_region
      _
    $region21: #{tpu_custom_call.1} parent=1 // pred_fallthru
      _
    // Predicated region
    $region22: #{tpu_custom_call.1} parent=1 // pred_check
      _
    $region23: #{tpu_custom_call.1} parent=1 // pred_check_branch
      %25 = sbr.rel (0) target = $region25
    $region24: #{tpu_custom_call.1} parent=1 // pred_region
      _
    $region25: #{tpu_custom_call.1} parent=1 // pred_fallthru
      _
    // Predicated region
    $region26: #{tpu_custom_call.1} parent=1 // pred_check
      _
    $region27: #{tpu_custom_call.1} parent=1 // pred_check_branch
      %27 = sbr.rel (0) target = $region29
    $region28: #{tpu_custom_call.1} parent=1 // pred_region
      %s29 = ssub.s32 16, 16
      %30 = vsyncadd [#allocation4], %s29
      %s32 = sshll.u32 %s6, 4
      %s33 = int_to_ptr.vmem [resolvable:$true] %s32
      %35 = dma.vmem_to_smem %s33, 16, [#allocation2], [#allocation4]
    $region29: #{tpu_custom_call.1} parent=1 // pred_fallthru
      _
    // Predicated region
    $region30: #{tpu_custom_call.1} parent=1 // pred_check
      _
    $region31: #{tpu_custom_call.1} parent=1 // pred_check_branch
      %37 = sbr.rel (0) target = $region33
    $region32: #{tpu_custom_call.1} parent=1 // pred_region
      %38 = dma.done [#allocation4], 16
    $region33: #{tpu_custom_call.1} parent=1 // pred_fallthru
      _
    %39 = sfence
    %v40 = vld [vmem:[%s0] sm:$0xff]
    %v41 = vld [vmem:[%s0 + $0x8] sm:$0xff]
    %v42 = vld [vmem:[%s0 + $0x10] sm:$0xff]
    %v43 = vld [vmem:[%s0 + $0x18] sm:$0xff]
    %v44 = vld [vmem:[%s5] sm:$0xff]
    %v45 = vld [vmem:[%s5 + $0x8] sm:$0xff]
    %v46 = vld [vmem:[%s5 + $0x10] sm:$0xff]
    %v47 = vld [vmem:[%s5 + $0x18] sm:$0xff]
    %s48 = scalar_lea.vmem %s5, 32
    %v49 = vld [vmem:[%s48] sm:$0xff]
    %v50 = vld [vmem:[%s48 + $0x8] sm:$0xff]
    %v51 = vld [vmem:[%s48 + $0x10] sm:$0xff]
    %v52 = vld [vmem:[%s48 + $0x18] sm:$0xff]
    %s53 = scalar_lea.vmem %s5, 64
    %v54 = vld [vmem:[%s53] sm:$0xff]
    %v55 = vld [vmem:[%s53 + $0x8] sm:$0xff]
    %v56 = vld [vmem:[%s53 + $0x10] sm:$0xff]
    %v57 = vld [vmem:[%s53 + $0x18] sm:$0xff]
    %s58 = scalar_lea.vmem %s5, 96
    %v59 = vld [vmem:[%s58] sm:$0xff]
    %v60 = vld [vmem:[%s58 + $0x8] sm:$0xff]
    %s61 = scalar_lea.vmem %s5, 128
    %v62 = vld [vmem:[%s61] sm:$0xff]
    %v63 = vld [vmem:[%s61 + $0x8] sm:$0xff]
    %v64 = vld [vmem:[%s61 + $0x10] sm:$0xff]
    %v65 = vld [vmem:[%s61 + $0x18] sm:$0xff]
    %s66 = scalar_lea.vmem %s5, 160
    %v67 = vld [vmem:[%s66] sm:$0xff]
    %v68 = vld [vmem:[%s66 + $0x8] sm:$0xff]
    %v69 = vld [vmem:[%s66 + $0x10] sm:$0xff]
    %v70 = vld [vmem:[%s66 + $0x18] sm:$0xff]
    %s71 = scalar_lea.vmem %s5, 192
    %v72 = vld [vmem:[%s71] sm:$0xff]
    %v73 = vld [vmem:[%s71 + $0x8] sm:$0xff]
    %v74 = vld [vmem:[%s71 + $0x10] sm:$0xff]
    %v75 = vld [vmem:[%s71 + $0x18] sm:$0xff]
    %s76 = scalar_lea.vmem %s5, 224
    %v77 = vld [vmem:[%s76] sm:$0xff]
    %v78 = vld [vmem:[%s76 + $0x8] sm:$0xff]
    %v79 = vld [vmem:[%s76 + $0x10] sm:$0xff]
    %v80 = vld [vmem:[%s76 + $0x18] sm:$0xff]
    %s81 = scalar_lea.vmem %s5, 256
    %v82 = vld [vmem:[%s81] sm:$0xff]
    %v83 = vld [vmem:[%s81 + $0x8] sm:$0xff]
    %s84 = sld [smem:[#allocation2]]
    %s85 = sld [smem:[#allocation2 + $0x1]]
    %v86 = vld [vmem:[%s1] sm:$0xff]
    %v87 = vld [vmem:[%s1 + $0x8] sm:$0xff]
    %v88 = vld [vmem:[%s1 + $0x10] sm:$0xff]
    %v89 = vld [vmem:[%s1 + $0x18] sm:$0xff]
    %vm90 = vcmask 261120
    %v92 = vsel %vm90, %v86, 0
    %v95 = vsel %vm90, %v87, 0
    %v98 = vsel %vm90, %v88, 0
    %v101 = vsel %vm90, %v89, 0
    %103 = vmatprep.subr.mxu0 0.0
    %104 = vmatpush1.msra.mxu0 %v40
    %105 = vmatprep.subr.mxu0 0.0
    %106 = vmatpush1.msra.mxu0 %v41
    %107 = vmatprep.subr.mxu0 0.0
    %108 = vmatpush1.msra.mxu0 %v42
    %109 = vmatprep.subr.mxu0 0.0
    %110 = vmatpush1.msra.mxu0 %v43
    %111 = vmatprep.subr.mxu0 0.0
    %112 = vmatpush1.msra.mxu0 0.0
    %113 = vmatprep.subr.mxu0 0.0
    %114 = vmatpush1.msra.mxu0 0.0
    %115 = vmatprep.subr.mxu0 0.0
    %116 = vmatpush1.msra.mxu0 0.0
    %117 = vmatprep.subr.mxu0 0.0
    %118 = vmatpush1.msra.mxu0 0.0
    %119 = vmatprep.subr.mxu0 0.0
    %120 = vmatpush1.msra.mxu0 0.0
    %121 = vmatprep.subr.mxu0 0.0
    %122 = vmatpush1.msra.mxu0 0.0
    %123 = vmatprep.subr.mxu0 0.0
    %124 = vmatpush1.msra.mxu0 0.0
    %125 = vmatprep.subr.mxu0 0.0
    %126 = vmatpush1.msra.mxu0 0.0
    %127 = vmatprep.subr.mxu0 0.0
    %128 = vmatpush1.msra.mxu0 0.0
    %129 = vmatprep.subr.mxu0 0.0
    %130 = vmatpush1.msra.mxu0 0.0
    %131 = vmatprep.subr.mxu0 0.0
    %132 = vmatpush1.msra.mxu0 0.0
    %133 = vmatprep.subr.mxu0 0.0
    %134 = vmatpush1.msra.mxu0 0.0
    %135 = vmatprep.subr.mxu0 0.0
    %136 = vmatpush1.msra.mxu0 0.0
    %137 = vmatprep.subr.mxu0 0.0
    %138 = vmatpush1.msra.mxu0 0.0
    %139 = vmatprep.subr.mxu0 0.0
    %140 = vmatpush1.msra.mxu0 0.0
    %141 = vmatprep.subr.mxu0 0.0
    %142 = vmatpush1.msra.mxu0 0.0
    %143 = vmatprep.subr.mxu0 0.0
    %144 = vmatpush1.msra.mxu0 0.0
    %145 = vmatprep.subr.mxu0 0.0
    %146 = vmatpush1.msra.mxu0 0.0
    %147 = vmatprep.subr.mxu0 0.0
    %148 = vmatpush1.msra.mxu0 0.0
    %149 = vmatprep.subr.mxu0 0.0
    %150 = vmatpush1.msra.mxu0 0.0
    %151 = vmatprep.subr.mxu0 0.0
    %152 = vmatpush1.msra.mxu0 0.0
    %153 = vmatprep.subr.mxu0 0.0
    %154 = vmatpush1.msra.mxu0 0.0
    %155 = vmatprep.subr.mxu0 0.0
    %156 = vmatpush1.msra.mxu0 0.0
    %157 = vmatprep.subr.mxu0 0.0
    %158 = vmatpush1.msra.mxu0 0.0
    %159 = vmatprep.subr.mxu0 0.0
    %160 = vmatpush1.msra.mxu0 0.0
    %161 = vmatprep.subr.mxu0 0.0
    %162 = vmatpush1.msra.mxu0 0.0
    %163 = vmatprep.subr.mxu0 0.0
    %164 = vmatpush1.msra.mxu0 0.0
    %165 = vmatprep.subr.mxu0 0.0
    %166 = vmatpush1.msra.mxu0 0.0
    %167 = vmatprep.mubr.f32.mxu0 0.0
    %168 = vmatmul.mubr.f32.gmra.mrb[0].mxu0 %v92
    %v169 = vpop.f32.mrb[0].mxu0
    %v170 = vadd.f32 0.0, %v169
    %v171 = vpop.f32.mrb[0].mxu0
    %172 = vmatprep.mubr.f32.mxu0 0.0
    %173 = vmatmul.mubr.f32.gmra.mrb[0].mxu0 %v95
    %v174 = vpop.f32.mrb[0].mxu0
    %v175 = vadd.f32 0.0, %v174
    %v176 = vpop.f32.mrb[0].mxu0
    %177 = vmatprep.mubr.f32.mxu0 0.0
    %178 = vmatmul.mubr.f32.gmra.mrb[0].mxu0 %v98
    %v179 = vpop.f32.mrb[0].mxu0
    %v180 = vadd.f32 0.0, %v179
    %v181 = vpop.f32.mrb[0].mxu0
    %182 = vmatprep.mubr.f32.mxu0 0.0
    %183 = vmatmul.mubr.f32.gmra.mrb[0].mxu0 %v101
    %v184 = vpop.f32.mrb[0].mxu0
    %v185 = vadd.f32 0.0, %v184
    %v186 = vpop.f32.mrb[0].mxu0
    %187 = vdwg.mxu0
    %v188 = vmax.f32 %v170, 0.0
    %v189 = vmax.f32 %v175, 0.0
    %v190 = vmax.f32 %v180, 0.0
    %v191 = vmax.f32 %v185, 0.0
    %193 = vset.pattern.permute.xlu0 0
    %194 = vperm.xlu0 %193, %v44
    %v195 = vpop.permute.xlu0 %194
    %198 = vset.pattern.permute.xlu0 0
    %199 = vperm.xlu0 %198, %v45
    %v200 = vpop.permute.xlu0 %199
    %203 = vset.pattern.permute.xlu0 0
    %204 = vperm.xlu0 %203, %v46
    %v205 = vpop.permute.xlu0 %204
    %208 = vset.pattern.permute.xlu0 0
    %209 = vperm.xlu0 %208, %v47
    %v210 = vpop.permute.xlu0 %209
    %v212 = vmul.f32 %v188, %v195
    %v213 = vmul.f32 %v189, %v200
    %v214 = vmul.f32 %v190, %v205
    %v215 = vmul.f32 %v191, %v210
    %v216 = vadd.f32 %v212, %v213
    %v217 = vadd.f32 %v216, %v214
    %v218 = vadd.f32 %v217, %v215
    %v219 = vrot.slane %v218, 4
    %v220 = vadd.f32 %v218, %v219
    %v221 = vrot.slane %v220, 2
    %v222 = vadd.f32 %v220, %v221
    %v223 = vrot.slane %v222, 1
    %v224 = vadd.f32 %v222, %v223
    %v225 = vstv %s84
    %v226 = vadd.f32 %v224, %v225
    %v227 = vmax.f32 %v226, 0.0
    %229 = vset.pattern.permute.xlu0 0
    %230 = vperm.xlu0 %229, %v49
    %v231 = vpop.permute.xlu0 %230
    %234 = vset.pattern.permute.xlu0 0
    %235 = vperm.xlu0 %234, %v50
    %v236 = vpop.permute.xlu0 %235
    %239 = vset.pattern.permute.xlu0 0
    %240 = vperm.xlu0 %239, %v51
    %v241 = vpop.permute.xlu0 %240
    %244 = vset.pattern.permute.xlu0 0
    %245 = vperm.xlu0 %244, %v52
    %v246 = vpop.permute.xlu0 %245
    %v248 = vmul.f32 %v231, %v227
    %v249 = vmul.f32 %v236, %v227
    %v250 = vmul.f32 %v241, %v227
    %v251 = vmul.f32 %v246, %v227
    %v252 = vadd.f32 %v188, %v248
    %v253 = vadd.f32 %v189, %v249
    %v254 = vadd.f32 %v190, %v250
    %v255 = vadd.f32 %v191, %v251
    %257 = vset.pattern.permute.xlu0 0
    %258 = vperm.xlu0 %257, %v54
    %v259 = vpop.permute.xlu0 %258
    %262 = vset.pattern.permute.xlu0 0
    %263 = vperm.xlu0 %262, %v55
    %v264 = vpop.permute.xlu0 %263
    %267 = vset.pattern.permute.xlu0 0
    %268 = vperm.xlu0 %267, %v56
    %v269 = vpop.permute.xlu0 %268
    %272 = vset.pattern.permute.xlu0 0
    %273 = vperm.xlu0 %272, %v57
    %v274 = vpop.permute.xlu0 %273
    %v276 = vadd.f32 %v252, %v259
    %v277 = vadd.f32 %v253, %v264
    %v278 = vadd.f32 %v254, %v269
    %v279 = vadd.f32 %v255, %v274
    %v280 = vmax.f32 %v276, 0.0
    %v281 = vmax.f32 %v277, 0.0
    %v282 = vmax.f32 %v278, 0.0
    %v283 = vmax.f32 %v279, 0.0
    %v284 = vld [vmem:[%s2] sm:$0xff]
    %v285 = vld [vmem:[%s2 + $0x8] sm:$0xff]
    %287 = vset.pattern.permute.xlu0 0
    %288 = vperm.xlu0 %287, %v59
    %v289 = vpop.permute.xlu0 %288
    %292 = vset.pattern.permute.xlu0 0
    %293 = vperm.xlu0 %292, %v60
    %v294 = vpop.permute.xlu0 %293
    %v297 = vsel %vm90, %v284, 0
    %v300 = vsel %vm90, %v285, 0
    %302 = vmatprep.subr.mxu0 0.0
    %303 = vmatpush1.msra.mxu0 %v280
    %304 = vmatprep.subr.mxu0 0.0
    %305 = vmatpush1.msra.mxu0 %v281
    %306 = vmatprep.subr.mxu0 0.0
    %307 = vmatpush1.msra.mxu0 %v282
    %308 = vmatprep.subr.mxu0 0.0
    %309 = vmatpush1.msra.mxu0 %v283
    %310 = vmatprep.subr.mxu0 0.0
    %311 = vmatpush1.msra.mxu0 0.0
    %312 = vmatprep.subr.mxu0 0.0
    %313 = vmatpush1.msra.mxu0 0.0
    %314 = vmatprep.subr.mxu0 0.0
    %315 = vmatpush1.msra.mxu0 0.0
    %316 = vmatprep.subr.mxu0 0.0
    %317 = vmatpush1.msra.mxu0 0.0
    %318 = vmatprep.subr.mxu0 0.0
    %319 = vmatpush1.msra.mxu0 0.0
    %320 = vmatprep.subr.mxu0 0.0
    %321 = vmatpush1.msra.mxu0 0.0
    %322 = vmatprep.subr.mxu0 0.0
    %323 = vmatpush1.msra.mxu0 0.0
    %324 = vmatprep.subr.mxu0 0.0
    %325 = vmatpush1.msra.mxu0 0.0
    %326 = vmatprep.subr.mxu0 0.0
    %327 = vmatpush1.msra.mxu0 0.0
    %328 = vmatprep.subr.mxu0 0.0
    %329 = vmatpush1.msra.mxu0 0.0
    %330 = vmatprep.subr.mxu0 0.0
    %331 = vmatpush1.msra.mxu0 0.0
    %332 = vmatprep.subr.mxu0 0.0
    %333 = vmatpush1.msra.mxu0 0.0
    %334 = vmatprep.subr.mxu0 0.0
    %335 = vmatpush1.msra.mxu0 0.0
    %336 = vmatprep.subr.mxu0 0.0
    %337 = vmatpush1.msra.mxu0 0.0
    %338 = vmatprep.subr.mxu0 0.0
    %339 = vmatpush1.msra.mxu0 0.0
    %340 = vmatprep.subr.mxu0 0.0
    %341 = vmatpush1.msra.mxu0 0.0
    %342 = vmatprep.subr.mxu0 0.0
    %343 = vmatpush1.msra.mxu0 0.0
    %344 = vmatprep.subr.mxu0 0.0
    %345 = vmatpush1.msra.mxu0 0.0
    %346 = vmatprep.subr.mxu0 0.0
    %347 = vmatpush1.msra.mxu0 0.0
    %348 = vmatprep.subr.mxu0 0.0
    %349 = vmatpush1.msra.mxu0 0.0
    %350 = vmatprep.subr.mxu0 0.0
    %351 = vmatpush1.msra.mxu0 0.0
    %352 = vmatprep.subr.mxu0 0.0
    %353 = vmatpush1.msra.mxu0 0.0
    %354 = vmatprep.subr.mxu0 0.0
    %355 = vmatpush1.msra.mxu0 0.0
    %356 = vmatprep.subr.mxu0 0.0
    %357 = vmatpush1.msra.mxu0 0.0
    %358 = vmatprep.subr.mxu0 0.0
    %359 = vmatpush1.msra.mxu0 0.0
    %360 = vmatprep.subr.mxu0 0.0
    %361 = vmatpush1.msra.mxu0 0.0
    %362 = vmatprep.subr.mxu0 0.0
    %363 = vmatpush1.msra.mxu0 0.0
    %364 = vmatprep.subr.mxu0 0.0
    %365 = vmatpush1.msra.mxu0 0.0
    %366 = vmatprep.mubr.f32.mxu0 0.0
    %367 = vmatmul.mubr.f32.gmra.mrb[0].mxu0 %v297
    %v368 = vpop.f32.mrb[0].mxu0
    %v369 = vadd.f32 %v289, %v368
    %v370 = vpop.f32.mrb[0].mxu0
    %371 = vmatprep.mubr.f32.mxu0 0.0
    %372 = vmatmul.mubr.f32.gmra.mrb[0].mxu0 %v300
    %v373 = vpop.f32.mrb[0].mxu0
    %v374 = vadd.f32 %v294, %v373
    %v375 = vpop.f32.mrb[0].mxu0
    %376 = vdwg.mxu0
    %v377 = vmul.f32 %v374, 1.442695
    %v378 = vpow.pop %v377
    %v379 = vmul.f32 %v378, %v42
    %v380 = vadd.f32 %v369, %v379
    %v381 = vld [vmem:[%s3] sm:$0xff]
    %v382 = vld [vmem:[%s3 + $0x8] sm:$0xff]
    %v383 = vld [vmem:[%s3 + $0x10] sm:$0xff]
    %v384 = vld [vmem:[%s3 + $0x18] sm:$0xff]
    %386 = vset.pattern.permute.xlu0 0
    %387 = vperm.xlu0 %386, %v62
    %v388 = vpop.permute.xlu0 %387
    %391 = vset.pattern.permute.xlu0 0
    %392 = vperm.xlu0 %391, %v63
    %v393 = vpop.permute.xlu0 %392
    %396 = vset.pattern.permute.xlu0 0
    %397 = vperm.xlu0 %396, %v64
    %v398 = vpop.permute.xlu0 %397
    %401 = vset.pattern.permute.xlu0 0
    %402 = vperm.xlu0 %401, %v65
    %v403 = vpop.permute.xlu0 %402
    %vm405 = vcmask 64512
    %v407 = vsel %vm405, %v381, 0
    %v410 = vsel %vm405, %v382, 0
    %v413 = vsel %vm405, %v383, 0
    %v416 = vsel %vm405, %v384, 0
    %418 = vmatprep.subr.mxu0 0.0
    %419 = vmatpush1.msra.mxu0 %v380
    %420 = vmatprep.subr.mxu0 0.0
    %421 = vmatpush1.msra.mxu0 0.0
    %422 = vmatprep.subr.mxu0 0.0
    %423 = vmatpush1.msra.mxu0 0.0
    %424 = vmatprep.subr.mxu0 0.0
    %425 = vmatpush1.msra.mxu0 0.0
    %426 = vmatprep.subr.mxu0 0.0
    %427 = vmatpush1.msra.mxu0 0.0
    %428 = vmatprep.subr.mxu0 0.0
    %429 = vmatpush1.msra.mxu0 0.0
    %430 = vmatprep.subr.mxu0 0.0
    %431 = vmatpush1.msra.mxu0 0.0
    %432 = vmatprep.subr.mxu0 0.0
    %433 = vmatpush1.msra.mxu0 0.0
    %434 = vmatprep.subr.mxu0 0.0
    %435 = vmatpush1.msra.mxu0 0.0
    %436 = vmatprep.subr.mxu0 0.0
    %437 = vmatpush1.msra.mxu0 0.0
    %438 = vmatprep.subr.mxu0 0.0
    %439 = vmatpush1.msra.mxu0 0.0
    %440 = vmatprep.subr.mxu0 0.0
    %441 = vmatpush1.msra.mxu0 0.0
    %442 = vmatprep.subr.mxu0 0.0
    %443 = vmatpush1.msra.mxu0 0.0
    %444 = vmatprep.subr.mxu0 0.0
    %445 = vmatpush1.msra.mxu0 0.0
    %446 = vmatprep.subr.mxu0 0.0
    %447 = vmatpush1.msra.mxu0 0.0
    %448 = vmatprep.subr.mxu0 0.0
    %449 = vmatpush1.msra.mxu0 0.0
    %450 = vmatprep.subr.mxu0 0.0
    %451 = vmatpush1.msra.mxu0 0.0
    %452 = vmatprep.subr.mxu0 0.0
    %453 = vmatpush1.msra.mxu0 0.0
    %454 = vmatprep.subr.mxu0 0.0
    %455 = vmatpush1.msra.mxu0 0.0
    %456 = vmatprep.subr.mxu0 0.0
    %457 = vmatpush1.msra.mxu0 0.0
    %458 = vmatprep.subr.mxu0 0.0
    %459 = vmatpush1.msra.mxu0 0.0
    %460 = vmatprep.subr.mxu0 0.0
    %461 = vmatpush1.msra.mxu0 0.0
    %462 = vmatprep.subr.mxu0 0.0
    %463 = vmatpush1.msra.mxu0 0.0
    %464 = vmatprep.subr.mxu0 0.0
    %465 = vmatpush1.msra.mxu0 0.0
    %466 = vmatprep.subr.mxu0 0.0
    %467 = vmatpush1.msra.mxu0 0.0
    %468 = vmatprep.subr.mxu0 0.0
    %469 = vmatpush1.msra.mxu0 0.0
    %470 = vmatprep.subr.mxu0 0.0
    %471 = vmatpush1.msra.mxu0 0.0
    %472 = vmatprep.subr.mxu0 0.0
    %473 = vmatpush1.msra.mxu0 0.0
    %474 = vmatprep.subr.mxu0 0.0
    %475 = vmatpush1.msra.mxu0 0.0
    %476 = vmatprep.subr.mxu0 0.0
    %477 = vmatpush1.msra.mxu0 0.0
    %478 = vmatprep.subr.mxu0 0.0
    %479 = vmatpush1.msra.mxu0 0.0
    %480 = vmatprep.subr.mxu0 0.0
    %481 = vmatpush1.msra.mxu0 0.0
    %482 = vmatprep.mubr.f32.mxu0 0.0
    %483 = vmatmul.mubr.f32.gmra.mrb[0].mxu0 %v407
    %v484 = vpop.f32.mrb[0].mxu0
    %v485 = vadd.f32 %v388, %v484
    %v486 = vpop.f32.mrb[0].mxu0
    %487 = vmatprep.mubr.f32.mxu0 0.0
    %488 = vmatmul.mubr.f32.gmra.mrb[0].mxu0 %v410
    %v489 = vpop.f32.mrb[0].mxu0
    %v490 = vadd.f32 %v393, %v489
    %v491 = vpop.f32.mrb[0].mxu0
    %492 = vmatprep.mubr.f32.mxu0 0.0
    %493 = vmatmul.mubr.f32.gmra.mrb[0].mxu0 %v413
    %v494 = vpop.f32.mrb[0].mxu0
    %v495 = vadd.f32 %v398, %v494
    %v496 = vpop.f32.mrb[0].mxu0
    %497 = vmatprep.mubr.f32.mxu0 0.0
    %498 = vmatmul.mubr.f32.gmra.mrb[0].mxu0 %v416
    %v499 = vpop.f32.mrb[0].mxu0
    %v500 = vadd.f32 %v403, %v499
    %v501 = vpop.f32.mrb[0].mxu0
    %502 = vdwg.mxu0
    %v503 = vmax.f32 %v485, 0.0
    %v504 = vmax.f32 %v490, 0.0
    %v505 = vmax.f32 %v495, 0.0
    %v506 = vmax.f32 %v500, 0.0
    %508 = vset.pattern.permute.xlu0 0
    %509 = vperm.xlu0 %508, %v67
    %v510 = vpop.permute.xlu0 %509
    %513 = vset.pattern.permute.xlu0 0
    %514 = vperm.xlu0 %513, %v68
    %v515 = vpop.permute.xlu0 %514
    %518 = vset.pattern.permute.xlu0 0
    %519 = vperm.xlu0 %518, %v69
    %v520 = vpop.permute.xlu0 %519
    %523 = vset.pattern.permute.xlu0 0
    %524 = vperm.xlu0 %523, %v70
    %v525 = vpop.permute.xlu0 %524
    %v527 = vmul.f32 %v503, %v510
    %v528 = vmul.f32 %v504, %v515
    %v529 = vmul.f32 %v505, %v520
    %v530 = vmul.f32 %v506, %v525
    %v531 = vadd.f32 %v527, %v528
    %v532 = vadd.f32 %v531, %v529
    %v533 = vadd.f32 %v532, %v530
    %v534 = vrot.slane %v533, 4
    %v535 = vadd.f32 %v533, %v534
    %v536 = vrot.slane %v535, 2
    %v537 = vadd.f32 %v535, %v536
    %v538 = vrot.slane %v537, 1
    %v539 = vadd.f32 %v537, %v538
    %v540 = vstv %s85
    %v541 = vadd.f32 %v539, %v540
    %v542 = vmax.f32 %v541, 0.0
    %544 = vset.pattern.permute.xlu0 0
    %545 = vperm.xlu0 %544, %v72
    %v546 = vpop.permute.xlu0 %545
    %549 = vset.pattern.permute.xlu0 0
    %550 = vperm.xlu0 %549, %v73
    %v551 = vpop.permute.xlu0 %550
    %554 = vset.pattern.permute.xlu0 0
    %555 = vperm.xlu0 %554, %v74
    %v556 = vpop.permute.xlu0 %555
    %559 = vset.pattern.permute.xlu0 0
    %560 = vperm.xlu0 %559, %v75
    %v561 = vpop.permute.xlu0 %560
    %v563 = vmul.f32 %v546, %v542
    %v564 = vmul.f32 %v551, %v542
    %v565 = vmul.f32 %v556, %v542
    %v566 = vmul.f32 %v561, %v542
    %v567 = vadd.f32 %v503, %v563
    %v568 = vadd.f32 %v504, %v564
    %v569 = vadd.f32 %v505, %v565
    %v570 = vadd.f32 %v506, %v566
    %572 = vset.pattern.permute.xlu0 0
    %573 = vperm.xlu0 %572, %v77
    %v574 = vpop.permute.xlu0 %573
    %577 = vset.pattern.permute.xlu0 0
    %578 = vperm.xlu0 %577, %v78
    %v579 = vpop.permute.xlu0 %578
    %582 = vset.pattern.permute.xlu0 0
    %583 = vperm.xlu0 %582, %v79
    %v584 = vpop.permute.xlu0 %583
    %587 = vset.pattern.permute.xlu0 0
    %588 = vperm.xlu0 %587, %v80
    %v589 = vpop.permute.xlu0 %588
    %v591 = vadd.f32 %v567, %v574
    %v592 = vadd.f32 %v568, %v579
    %v593 = vadd.f32 %v569, %v584
    %v594 = vadd.f32 %v570, %v589
    %v595 = vmax.f32 %v591, 0.0
    %v596 = vmax.f32 %v592, 0.0
    %v597 = vmax.f32 %v593, 0.0
    %v598 = vmax.f32 %v594, 0.0
    %v599 = vld [vmem:[%s4] sm:$0xff]
    %v600 = vld [vmem:[%s4 + $0x8] sm:$0xff]
    %602 = vset.pattern.permute.xlu0 0
    %603 = vperm.xlu0 %602, %v82
    %v604 = vpop.permute.xlu0 %603
    %607 = vset.pattern.permute.xlu0 0
    %608 = vperm.xlu0 %607, %v83
    %v609 = vpop.permute.xlu0 %608
    %v612 = vsel %vm90, %v599, 0
    %v615 = vsel %vm90, %v600, 0
    %617 = vmatprep.subr.mxu0 0.0
    %618 = vmatpush1.msra.mxu0 %v595
    %619 = vmatprep.subr.mxu0 0.0
    %620 = vmatpush1.msra.mxu0 %v596
    %621 = vmatprep.subr.mxu0 0.0
    %622 = vmatpush1.msra.mxu0 %v597
    %623 = vmatprep.subr.mxu0 0.0
    %624 = vmatpush1.msra.mxu0 %v598
    %625 = vmatprep.subr.mxu0 0.0
    %626 = vmatpush1.msra.mxu0 0.0
    %627 = vmatprep.subr.mxu0 0.0
    %628 = vmatpush1.msra.mxu0 0.0
    %629 = vmatprep.subr.mxu0 0.0
    %630 = vmatpush1.msra.mxu0 0.0
    %631 = vmatprep.subr.mxu0 0.0
    %632 = vmatpush1.msra.mxu0 0.0
    %633 = vmatprep.subr.mxu0 0.0
    %634 = vmatpush1.msra.mxu0 0.0
    %635 = vmatprep.subr.mxu0 0.0
    %636 = vmatpush1.msra.mxu0 0.0
    %637 = vmatprep.subr.mxu0 0.0
    %638 = vmatpush1.msra.mxu0 0.0
    %639 = vmatprep.subr.mxu0 0.0
    %640 = vmatpush1.msra.mxu0 0.0
    %641 = vmatprep.subr.mxu0 0.0
    %642 = vmatpush1.msra.mxu0 0.0
    %643 = vmatprep.subr.mxu0 0.0
    %644 = vmatpush1.msra.mxu0 0.0
    %645 = vmatprep.subr.mxu0 0.0
    %646 = vmatpush1.msra.mxu0 0.0
    %647 = vmatprep.subr.mxu0 0.0
    %648 = vmatpush1.msra.mxu0 0.0
    %649 = vmatprep.subr.mxu0 0.0
    %650 = vmatpush1.msra.mxu0 0.0
    %651 = vmatprep.subr.mxu0 0.0
    %652 = vmatpush1.msra.mxu0 0.0
    %653 = vmatprep.subr.mxu0 0.0
    %654 = vmatpush1.msra.mxu0 0.0
    %655 = vmatprep.subr.mxu0 0.0
    %656 = vmatpush1.msra.mxu0 0.0
    %657 = vmatprep.subr.mxu0 0.0
    %658 = vmatpush1.msra.mxu0 0.0
    %659 = vmatprep.subr.mxu0 0.0
    %660 = vmatpush1.msra.mxu0 0.0
    %661 = vmatprep.subr.mxu0 0.0
    %662 = vmatpush1.msra.mxu0 0.0
    %663 = vmatprep.subr.mxu0 0.0
    %664 = vmatpush1.msra.mxu0 0.0
    %665 = vmatprep.subr.mxu0 0.0
    %666 = vmatpush1.msra.mxu0 0.0
    %667 = vmatprep.subr.mxu0 0.0
    %668 = vmatpush1.msra.mxu0 0.0
    %669 = vmatprep.subr.mxu0 0.0
    %670 = vmatpush1.msra.mxu0 0.0
    %671 = vmatprep.subr.mxu0 0.0
    %672 = vmatpush1.msra.mxu0 0.0
    %673 = vmatprep.subr.mxu0 0.0
    %674 = vmatpush1.msra.mxu0 0.0
    %675 = vmatprep.subr.mxu0 0.0
    %676 = vmatpush1.msra.mxu0 0.0
    %677 = vmatprep.subr.mxu0 0.0
    %678 = vmatpush1.msra.mxu0 0.0
    %679 = vmatprep.subr.mxu0 0.0
    %680 = vmatpush1.msra.mxu0 0.0
    %681 = vmatprep.mubr.f32.mxu0 0.0
    %682 = vmatmul.mubr.f32.gmra.mrb[0].mxu0 %v612
    %v683 = vpop.f32.mrb[0].mxu0
    %v684 = vadd.f32 %v604, %v683
    %v685 = vpop.f32.mrb[0].mxu0
    %686 = vmatprep.mubr.f32.mxu0 0.0
    %687 = vmatmul.mubr.f32.gmra.mrb[0].mxu0 %v615
    %v688 = vpop.f32.mrb[0].mxu0
    %v689 = vadd.f32 %v609, %v688
    %v690 = vpop.f32.mrb[0].mxu0
    %691 = vdwg.mxu0
    %692 = vst [vmem:[#allocation5] sm:$0xff] %v684
    %693 = vst [vmem:[#allocation5 + $0x8] sm:$0xff] %v689
    %694 = vst [vmem:[#allocation5 + $0x10] sm:$0xff] %v369
    %695 = vst [vmem:[#allocation5 + $0x18] sm:$0xff] %v378
    // Predicated region
    $region34: #{tpu_custom_call.1} parent=1 // pred_check
      _
    $region35: #{tpu_custom_call.1} parent=1 // pred_check_branch
      %697 = sbr.rel (0) target = $region37
    $region36: #{tpu_custom_call.1} parent=1 // pred_region
      %s699 = ssub.s32 512, 512
      %700 = vsyncadd [#allocation3], %s699
      %s701 = sshll.u32 [#allocation5], 4
      %s702 = int_to_ptr.vmem [resolvable:$true] %s701
      %707 = dma.vmem_to_hbm [thread:$0]  %s702, 512, %s7, [#allocation3], 128, 128, 8
    $region37: #{tpu_custom_call.1} parent=1 // pred_fallthru
      _
    // Predicated region
    $region38: #{tpu_custom_call.1} parent=1 // pred_check
      _
    $region39: #{tpu_custom_call.1} parent=1 // pred_check_branch
      %709 = sbr.rel (0) target = $region41
    $region40: #{tpu_custom_call.1} parent=1 // pred_region
      %710 = dma.done [#allocation3], 512
    $region41: #{tpu_custom_call.1} parent=1 // pred_fallthru
      _
    %711 = vsyncpa [#allocation3], 1
    %712 = vsyncpa [#allocation4], 1

</llo_original>
